<compile_context>
chip_gen: v7x
topology: tpu7x:2x2x1
jax: 0.10.0
libtpu: 0.0.40
codegen_flags: <defaults>
</compile_context>

<pallas_src>
import functools

import jax
import jax.numpy as jnp
from jax.experimental import pallas as pl
from jax.experimental.pallas import tpu as pltpu


# ----------------------------- helpers ---------------------------------------
def _lane_pack_factor(T, C):
    """How many time steps to fold into the lane axis (k*C <= 128)."""
    if C >= 128 or (128 % C) != 0:
        return 1
    k = 128 // C                      # power of two
    while k > 1 and (T % k) != 0:
        k //= 2
    return k


def _vmem_limits():
    """(vmem_limit_bytes for the compiler, planning budget for block sizing)."""
    try:
        cap = int(pltpu.get_tpu_info().vmem_capacity_bytes)
    except Exception:
        cap = 64 << 20                # v7x per-TensorCore VMEM (smallest current part)
    limit = min(cap * 3 // 4, 64 << 20)
    budget = limit * 3 // 4           # headroom for compiler-internal scratch
    return limit, budget


def _pick_block_batch(B, per_instance_bytes, budget_bytes,
                      min_steps=8, min_step_bytes=512 << 10):
    """Instances per grid step: fit VMEM, keep >=min_steps steps, amortize overhead."""
    per = max(int(per_instance_bytes), 1)
    bb = max(1, min(B, budget_bytes // per))            # fit the VMEM budget
    if B >= min_steps:
        bb_steps = max(1, B // min_steps)                # >= 4 steps per v7x TC
    elif B >= 2:
        bb_steps = max(1, B // 2)
    else:
        bb_steps = 1
    bb_floor = max(1, -(-min_step_bytes // per))         # don't go below ~512 KiB/step
    bb = min(bb, max(bb_steps, bb_floor))
    bb = max(1, min(bb, B))
    while B % bb:
        bb -= 1
    return bb


def _fold_lane_groups(s, k, C):
    """All-reduce the k lane-groups of each channel via an XLU roll butterfly.

    s: (BB, L) with L == k*C; lane j holds channel j % C, group j // C.
    After log2(k) roll+add steps every lane holds the sum over all k groups of
    its channel (k is a power of two because C divides 128)."""
    del k  # implied by s.shape[-1] // C
    shift = C
    total = s.shape[-1]
    while shift < total:
        s = s + pltpu.roll(s, shift=shift, axis=1)
        shift *= 2
    return s


# ----------------------------- norm kernel -----------------------------------
def _revin_norm_kernel(x_ref, w_ref, b_ref, y_ref, mean_ref, std_ref,
                       *, eps, inv_count, k, C):
    # x_ref: (BB, Tk, L) lane-dense; lane j holds channel j % C.
    w = w_ref[...].astype(jnp.float32)                       # (1, L)
    b = b_ref[...].astype(jnp.float32)                       # (1, L)

    # Pass 1: per-lane time sums -> per-channel mean (replicated across groups).
    s1 = jnp.sum(x_ref[...].astype(jnp.float32), axis=1)     # (BB, L)
    s1 = _fold_lane_groups(s1, k, C)
    mean_b = s1 * inv_count                                   # (BB, L)

    # Pass 2: centered sum of squares, reduced directly (no stored full tile).
    ssd = jnp.sum(
        jnp.square(x_ref[...].astype(jnp.float32) - mean_b[:, None, :]),
        axis=1)                                               # (BB, L)
    ssd = _fold_lane_groups(ssd, k, C)
    var_b = ssd * inv_count                                   # biased variance

    inv_std = jax.lax.rsqrt(var_b + eps)                      # EUP, no divide
    scale = w * inv_std                                        # (BB, L)
    shift = b - mean_b * scale                                 # (BB, L)

    # Apply: single broadcast FMA over the (BB, Tk, L) tile, lane-dense store.
    y_ref[...] = (x_ref[...].astype(jnp.float32) * scale[:, None, :]
                  + shift[:, None, :]).astype(y_ref.dtype)

    # Lane-dense stat stores (all L lanes hold the per-channel value after the
    # fold); the wrapper slices lanes [0:C].
    mean_ref[...] = mean_b[:, None, :].astype(mean_ref.dtype)
    std_ref[...] = jnp.sqrt(var_b + eps)[:, None, :].astype(std_ref.dtype)


# ---------------------------- denorm kernel ----------------------------------
def _revin_denorm_kernel(x_ref, scale_ref, shift_ref, y_ref):
    scale = scale_ref[...]                                    # (BB, 1, L) f32
    shift = shift_ref[...]                                    # (BB, 1, L) f32
    y_ref[...] = (x_ref[...].astype(jnp.float32) * scale + shift
                  ).astype(y_ref.dtype)


# ------------------------------- wrappers -------------------------------------
def revin_norm(x, weight, bias, eps=1e-5):
    """RevIN 'norm' mode. Returns (x_normalized, mean, stdev). x: (B, T, C)."""
    B, T, C = x.shape
    k = _lane_pack_factor(T, C)
    L, Tk = k * C, T // k
    # TODO(synk): pad C to a divisor of 128 when 128 % C != 0 so the lane axis
    # stays dense, and add a time-chunked ("arbitrary" grid axis over T) stats
    # path for very large T that does not fit a single VMEM block.

    x2 = x.reshape(B, Tk, L)                                  # free row-major reshape
    w2 = jnp.tile(weight.reshape(1, C).astype(jnp.float32), (1, k))
    b2 = jnp.tile(bias.reshape(1, C).astype(jnp.float32), (1, k))

    vmem_limit, budget = _vmem_limits()
    x_sz = jnp.dtype(x.dtype).itemsize
    # Honest per-instance footprint: double-buffered input + output blocks plus
    # ~2 full-tile f32 intermediates inside the kernel, plus the tiny stats.
    per_inst = Tk * L * (2 * x_sz + 2 * x_sz + 2 * 4) + 4 * L * 4
    bb = _pick_block_batch(B, per_inst, budget)

    kernel = functools.partial(_revin_norm_kernel, eps=float(eps),
                               inv_count=1.0 / float(T), k=k, C=C)
    grid_spec = pltpu.PrefetchScalarGridSpec(
        num_scalar_prefetch=0,
        grid=(B // bb,),
        in_specs=[
            pl.BlockSpec((bb, Tk, L), lambda i: (i, 0, 0)),
            pl.BlockSpec((1, L), lambda i: (0, 0)),
            pl.BlockSpec((1, L), lambda i: (0, 0)),
        ],
        out_specs=[
            pl.BlockSpec((bb, Tk, L), lambda i: (i, 0, 0)),
            pl.BlockSpec((bb, 1, L), lambda i: (i, 0, 0)),
            pl.BlockSpec((bb, 1, L), lambda i: (i, 0, 0)),
        ],
    )
    y2, mean_l, std_l = pl.pallas_call(
        kernel,
        out_shape=(
            jax.ShapeDtypeStruct((B, Tk, L), x.dtype),
            jax.ShapeDtypeStruct((B, 1, L), jnp.float32),
            jax.ShapeDtypeStruct((B, 1, L), jnp.float32),
        ),
        grid_spec=grid_spec,
        compiler_params=pltpu.CompilerParams(
            dimension_semantics=("parallel",),
            vmem_limit_bytes=int(vmem_limit)),
    )(x2, w2, b2)
    # Lanes 0..C-1 hold channels 0..C-1 (replicated across the k lane groups).
    return y2.reshape(B, T, C), mean_l[:, :, :C], std_l[:, :, :C]


def revin_denorm(x, mean, stdev, weight, bias, eps=1e-5):
    """RevIN 'denorm' mode, using (B,1,C) stats from a previous 'norm' pass."""
    B, T, C = x.shape
    k = _lane_pack_factor(T, C)
    L, Tk = k * C, T // k

    # Fold affine + stats into one scale/shift per (batch, channel) in XLA.
    # NOTE: division by (weight + eps^2) is faithful to PyTorch RevIN; it is
    # numerically delicate if a learned weight is ~ -eps^2 (documented, not "fixed").
    w = weight.reshape(1, 1, C).astype(jnp.float32)
    b = bias.reshape(1, 1, C).astype(jnp.float32)
    scale = stdev.reshape(B, 1, C).astype(jnp.float32) / (w + eps * eps)
    shift = mean.reshape(B, 1, C).astype(jnp.float32) - b * scale
    scale2 = jnp.tile(scale, (1, 1, k))                       # (B, 1, L) lane-dense
    shift2 = jnp.tile(shift, (1, 1, k))

    x2 = x.reshape(B, Tk, L)
    vmem_limit, budget = _vmem_limits()
    x_sz = jnp.dtype(x.dtype).itemsize
    per_inst = Tk * L * (2 * x_sz + 2 * x_sz + 1 * 4) + 2 * 2 * L * 4
    bb = _pick_block_batch(B, per_inst, budget)

    grid_spec = pltpu.PrefetchScalarGridSpec(
        num_scalar_prefetch=0,
        grid=(B // bb,),
        in_specs=[
            pl.BlockSpec((bb, Tk, L), lambda i: (i, 0, 0)),
            pl.BlockSpec((bb, 1, L), lambda i: (i, 0, 0)),
            pl.BlockSpec((bb, 1, L), lambda i: (i, 0, 0)),
        ],
        out_specs=pl.BlockSpec((bb, Tk, L), lambda i: (i, 0, 0)),
    )
    y2 = pl.pallas_call(
        _revin_denorm_kernel,
        out_shape=jax.ShapeDtypeStruct((B, Tk, L), x.dtype),
        grid_spec=grid_spec,
        compiler_params=pltpu.CompilerParams(
            dimension_semantics=("parallel",),
            vmem_limit_bytes=int(vmem_limit)),
    )(x2, scale2, shift2)
    return y2.reshape(B, T, C)


# ------------------------------ reference -------------------------------------
def _revin_norm_ref(x, weight, bias, eps=1e-5):
    mean = jnp.mean(x, axis=1, keepdims=True)
    var = jnp.var(x, axis=1, keepdims=True)           # biased (unbiased=False)
    stdev = jnp.sqrt(var + eps)
    xn = (x - mean) / stdev
    xn = xn * weight + bias
    return xn, mean, stdev


def _revin_denorm_ref(x, mean, stdev, weight, bias, eps=1e-5):
    x = (x - bias) / (weight + eps * eps)
    return x * stdev + mean


# --------------------------------- main ----------------------------------------
if __name__ == "__main__":
    B, T, C = 8, 256, 16   # batch, seq_len, num_features
    eps = 1e-5

    key = jax.random.PRNGKey(0)
    kx, kw, kb = jax.random.split(key, 3)
    x = jax.random.normal(kx, (B, T, C), dtype=jnp.float32) * 3.0 + 1.5
    affine_weight = 1.0 + 0.1 * jax.random.normal(kw, (C,), dtype=jnp.float32)
    affine_bias = 0.1 * jax.random.normal(kb, (C,), dtype=jnp.float32)

    # mode == 'norm'
    y, mean, stdev = revin_norm(x, affine_weight, affine_bias, eps=eps)
    jax.block_until_ready(y)

    y_ref, mean_ref, stdev_ref = _revin_norm_ref(x, affine_weight, affine_bias, eps)
    assert jnp.allclose(y, y_ref, atol=1e-4, rtol=1e-4)
    assert jnp.allclose(mean, mean_ref, atol=1e-4, rtol=1e-4)
    assert jnp.allclose(stdev, stdev_ref, atol=1e-4, rtol=1e-4)

    # mode == 'denorm' (uses stats from the norm pass, like the stateful module)
    x_rec = revin_denorm(y, mean, stdev, affine_weight, affine_bias, eps=eps)
    jax.block_until_ready(x_rec)

    x_rec_ref = _revin_denorm_ref(y_ref, mean_ref, stdev_ref,
                                  affine_weight, affine_bias, eps)
    assert jnp.allclose(x_rec, x_rec_ref, atol=1e-4, rtol=1e-4)
    # round-trip should recover the original x
    assert jnp.allclose(x_rec, x, atol=2e-4, rtol=2e-4)

    print("KERNEL_OK")
</pallas_src>

<mosaic_0001>
module attributes {stable_mosaic.version = 11 : i64} {
  func.func @_revin_norm_kernel(%arg0: i32, %arg1: memref<4x32x128xf32, #tpu.memory_space<vmem>>, %arg2: memref<1x128xf32, #tpu.memory_space<vmem>>, %arg3: memref<1x128xf32, #tpu.memory_space<vmem>>, %arg4: memref<4x32x128xf32, #tpu.memory_space<vmem>>, %arg5: memref<4x1x128xf32, #tpu.memory_space<vmem>>, %arg6: memref<4x1x128xf32, #tpu.memory_space<vmem>>) attributes {dimension_semantics = [#tpu.dimension_semantics<parallel>], iteration_bounds = array<i64: 2>, scalar_prefetch = 0 : i64, scratch_operands = 0 : i64, tpu.core_type = #tpu.core_type<tc>, window_params = [{transform_indices = @transform_0, window_bounds = array<i64: 4, 32, 128>}, {pipeline_mode = #tpu.pipeline_mode<synchronous>, transform_indices = @transform_1, window_bounds = array<i64: 1, 128>}, {pipeline_mode = #tpu.pipeline_mode<synchronous>, transform_indices = @transform_2, window_bounds = array<i64: 1, 128>}, {transform_indices = @transform_3, window_bounds = array<i64: 4, 32, 128>}, {transform_indices = @transform_4, window_bounds = array<i64: 4, 1, 128>}, {transform_indices = @transform_5, window_bounds = array<i64: 4, 1, 128>}]} {
    %c0 = arith.constant 0 : index
    %c0_0 = arith.constant 0 : index
    %0 = vector.load %arg2[%c0, %c0_0] : memref<1x128xf32, #tpu.memory_space<vmem>>, vector<1x128xf32>
    %c0_1 = arith.constant 0 : index
    %c0_2 = arith.constant 0 : index
    %1 = vector.load %arg3[%c0_1, %c0_2] : memref<1x128xf32, #tpu.memory_space<vmem>>, vector<1x128xf32>
    %c0_3 = arith.constant 0 : index
    %c0_4 = arith.constant 0 : index
    %c0_5 = arith.constant 0 : index
    %2 = vector.load %arg1[%c0_3, %c0_4, %c0_5] : memref<4x32x128xf32, #tpu.memory_space<vmem>>, vector<4x32x128xf32>
    %cst = arith.constant dense<0.000000e+00> : vector<4x128xf32>
    %3 = vector.multi_reduction <add>, %2, %cst [1] : vector<4x32x128xf32> to vector<4x128xf32>
    %c16_i32 = arith.constant 16 : i32
    %4 = tpu.dynamic_rotate %3 by %c16_i32 dim 1 : vector<4x128xf32>, i32 -> vector<4x128xf32>
    %5 = arith.addf %3, %4 : vector<4x128xf32>
    %c32_i32 = arith.constant 32 : i32
    %6 = tpu.dynamic_rotate %5 by %c32_i32 dim 1 : vector<4x128xf32>, i32 -> vector<4x128xf32>
    %7 = arith.addf %5, %6 : vector<4x128xf32>
    %c64_i32 = arith.constant 64 : i32
    %8 = tpu.dynamic_rotate %7 by %c64_i32 dim 1 : vector<4x128xf32>, i32 -> vector<4x128xf32>
    %9 = arith.addf %7, %8 : vector<4x128xf32>
    %cst_6 = arith.constant 3.906250e-03 : f32
    %10 = vector.broadcast %cst_6 : f32 to vector<4x128xf32>
    %11 = arith.mulf %9, %10 : vector<4x128xf32>
    %c0_7 = arith.constant 0 : index
    %c0_8 = arith.constant 0 : index
    %c0_9 = arith.constant 0 : index
    %12 = vector.load %arg1[%c0_7, %c0_8, %c0_9] : memref<4x32x128xf32, #tpu.memory_space<vmem>>, vector<4x32x128xf32>
    %13 = vector.shape_cast %11 : vector<4x128xf32> to vector<4x1x128xf32>
    %14 = vector.broadcast %13 : vector<4x1x128xf32> to vector<4x32x128xf32>
    %15 = arith.subf %12, %14 : vector<4x32x128xf32>
    %16 = arith.mulf %15, %15 : vector<4x32x128xf32>
    %cst_10 = arith.constant dense<0.000000e+00> : vector<4x128xf32>
    %17 = vector.multi_reduction <add>, %16, %cst_10 [1] : vector<4x32x128xf32> to vector<4x128xf32>
    %c16_i32_11 = arith.constant 16 : i32
    %18 = tpu.dynamic_rotate %17 by %c16_i32_11 dim 1 : vector<4x128xf32>, i32 -> vector<4x128xf32>
    %19 = arith.addf %17, %18 : vector<4x128xf32>
    %c32_i32_12 = arith.constant 32 : i32
    %20 = tpu.dynamic_rotate %19 by %c32_i32_12 dim 1 : vector<4x128xf32>, i32 -> vector<4x128xf32>
    %21 = arith.addf %19, %20 : vector<4x128xf32>
    %c64_i32_13 = arith.constant 64 : i32
    %22 = tpu.dynamic_rotate %21 by %c64_i32_13 dim 1 : vector<4x128xf32>, i32 -> vector<4x128xf32>
    %23 = arith.addf %21, %22 : vector<4x128xf32>
    %cst_14 = arith.constant 3.906250e-03 : f32
    %24 = vector.broadcast %cst_14 : f32 to vector<4x128xf32>
    %25 = arith.mulf %23, %24 : vector<4x128xf32>
    %cst_15 = arith.constant 9.99999974E-6 : f32
    %26 = vector.broadcast %cst_15 : f32 to vector<4x128xf32>
    %27 = arith.addf %25, %26 : vector<4x128xf32>
    %28 = math.rsqrt %27 : vector<4x128xf32>
    %29 = vector.broadcast %0 : vector<1x128xf32> to vector<4x128xf32>
    %30 = arith.mulf %29, %28 : vector<4x128xf32>
    %31 = arith.mulf %11, %30 : vector<4x128xf32>
    %32 = vector.broadcast %1 : vector<1x128xf32> to vector<4x128xf32>
    %33 = arith.subf %32, %31 : vector<4x128xf32>
    %c0_16 = arith.constant 0 : index
    %c0_17 = arith.constant 0 : index
    %c0_18 = arith.constant 0 : index
    %34 = vector.load %arg1[%c0_16, %c0_17, %c0_18] : memref<4x32x128xf32, #tpu.memory_space<vmem>>, vector<4x32x128xf32>
    %35 = vector.shape_cast %30 : vector<4x128xf32> to vector<4x1x128xf32>
    %36 = vector.broadcast %35 : vector<4x1x128xf32> to vector<4x32x128xf32>
    %37 = arith.mulf %34, %36 : vector<4x32x128xf32>
    %38 = vector.shape_cast %33 : vector<4x128xf32> to vector<4x1x128xf32>
    %39 = vector.broadcast %38 : vector<4x1x128xf32> to vector<4x32x128xf32>
    %40 = arith.addf %37, %39 : vector<4x32x128xf32>
    %c0_19 = arith.constant 0 : index
    %c0_20 = arith.constant 0 : index
    %c0_21 = arith.constant 0 : index
    %41 = vector.load %arg4[%c0_19, %c0_20, %c0_21] : memref<4x32x128xf32, #tpu.memory_space<vmem>>, vector<4x32x128xf32>
    tpu.vector_store %arg4[%c0_19, %c0_20, %c0_21], %40 {strides = array<i32>} : memref<4x32x128xf32, #tpu.memory_space<vmem>>, vector<4x32x128xf32>,
    %42 = vector.shape_cast %11 : vector<4x128xf32> to vector<4x1x128xf32>
    %c0_22 = arith.constant 0 : index
    %c0_23 = arith.constant 0 : index
    %c0_24 = arith.constant 0 : index
    %43 = vector.load %arg5[%c0_22, %c0_23, %c0_24] : memref<4x1x128xf32, #tpu.memory_space<vmem>>, vector<4x1x128xf32>
    tpu.vector_store %arg5[%c0_22, %c0_23, %c0_24], %42 {strides = array<i32>} : memref<4x1x128xf32, #tpu.memory_space<vmem>>, vector<4x1x128xf32>,
    %cst_25 = arith.constant 9.99999974E-6 : f32
    %44 = vector.broadcast %cst_25 : f32 to vector<4x128xf32>
    %45 = arith.addf %25, %44 : vector<4x128xf32>
    %46 = math.sqrt %45 : vector<4x128xf32>
    %47 = vector.shape_cast %46 : vector<4x128xf32> to vector<4x1x128xf32>
    %c0_26 = arith.constant 0 : index
    %c0_27 = arith.constant 0 : index
    %c0_28 = arith.constant 0 : index
    %48 = vector.load %arg6[%c0_26, %c0_27, %c0_28] : memref<4x1x128xf32, #tpu.memory_space<vmem>>, vector<4x1x128xf32>
    tpu.vector_store %arg6[%c0_26, %c0_27, %c0_28], %47 {strides = array<i32>} : memref<4x1x128xf32, #tpu.memory_space<vmem>>, vector<4x1x128xf32>,
    return
  }
  func.func @transform_0(%arg0: i32) -> (i32, i32, i32) {
    %c0_i32 = arith.constant 0 : i32
    %c0_i32_0 = arith.constant 0 : i32
    %c0_i32_1 = arith.constant 0 : i32
    return %arg0, %c0_i32, %c0_i32_0 : i32, i32, i32
  }
  func.func @transform_1(%arg0: i32) -> (i32, i32) {
    %c0_i32 = arith.constant 0 : i32
    %c0_i32_0 = arith.constant 0 : i32
    %c0_i32_1 = arith.constant 0 : i32
    return %c0_i32, %c0_i32_0 : i32, i32
  }
  func.func @transform_2(%arg0: i32) -> (i32, i32) {
    %c0_i32 = arith.constant 0 : i32
    %c0_i32_0 = arith.constant 0 : i32
    %c0_i32_1 = arith.constant 0 : i32
    return %c0_i32, %c0_i32_0 : i32, i32
  }
  func.func @transform_3(%arg0: i32) -> (i32, i32, i32) {
    %c0_i32 = arith.constant 0 : i32
    %c0_i32_0 = arith.constant 0 : i32
    %c0_i32_1 = arith.constant 0 : i32
    return %arg0, %c0_i32, %c0_i32_0 : i32, i32, i32
  }
  func.func @transform_4(%arg0: i32) -> (i32, i32, i32) {
    %c0_i32 = arith.constant 0 : i32
    %c0_i32_0 = arith.constant 0 : i32
    %c0_i32_1 = arith.constant 0 : i32
    return %arg0, %c0_i32, %c0_i32_0 : i32, i32, i32
  }
  func.func @transform_5(%arg0: i32) -> (i32, i32, i32) {
    %c0_i32 = arith.constant 0 : i32
    %c0_i32_0 = arith.constant 0 : i32
    %c0_i32_1 = arith.constant 0 : i32
    return %arg0, %c0_i32, %c0_i32_0 : i32, i32, i32
  }
}

</mosaic_0001>

<llo_original>
// kernel: tpu_custom_call.1
$region0: #{tpu_custom_call.1}
  #allocation0 [shape = 'u32[]', space=smem, size = 0x4, offset = 0x4, fixed_abs, tag = 'smem constant byte address 0x4 - core index']
  #allocation1 [shape = 'u32[144,128]{1,0:T(1,128)}', space=vmem, size = 0x12000, scoped, tag = 'internal scratch']
  %s0 = inlined_call_operand.hbm [shape: f32[8,32,128], index: 0, kind: input, shape index: {}]
  %s1 = inlined_call_operand.vmem [shape: f32[1,128], index: 1, kind: input, shape index: {}]
  %s2 = inlined_call_operand.vmem [shape: f32[1,128], index: 2, kind: input, shape index: {}]
  %s3 = inlined_call_operand.hbm [shape: f32[8,32,128], index: 3, kind: output, shape index: {0}]
  %s4 = inlined_call_operand.hbm [shape: f32[8,1,128], index: 4, kind: output, shape index: {1}]
  %s5 = inlined_call_operand.hbm [shape: f32[8,1,128], index: 5, kind: output, shape index: {2}]
  %6 = xla_tuple %s3, %s4, %s5
  %s7 = sld [smem:[#allocation0]]
  $region65: #{tpu_custom_call.1} parent=0
    _
  %s9 = ssub.s32 1, %s7
  %s10 = scalar_select 0, %s9, %s7
  $region1: #{tpu_custom_call.1} parent=0
    #allocation2 [shape = 'u8[131072]{0}', space=vmem, size = 0x20000, scoped, tag = 'input window, operand 0']
    #allocation3 [shape = 's32[2]{0}', space=sflag, size = 0x8, scoped, tag = 'scoped memory for tpu_custom_call.1']
    #allocation4 [shape = 's32[2]{0}', space=sflag, size = 0x8, scoped, tag = 'scoped memory for tpu_custom_call.1']
    #allocation5 [shape = 'u8[131072]{0}', space=vmem, size = 0x20000, scoped, tag = 'output window, operand 0']
    #allocation6 [shape = 'u8[4096]{0}', space=vmem, size = 0x1000, scoped, tag = 'output window, operand 1']
    #allocation7 [shape = 's32[2]{0}', space=sflag, size = 0x8, scoped, tag = 'scoped memory for tpu_custom_call.1']
    #allocation8 [shape = 'u8[4096]{0}', space=vmem, size = 0x1000, scoped, tag = 'output window, operand 2']
    %11 = vsyncpa [#allocation3], 0
    %s12 = scalar_lea.sflag [#allocation3], 1
    %13 = vsyncpa %s12, 0
    %14 = vsyncpa [#allocation4], 0
    %s15 = scalar_lea.sflag [#allocation4], 1
    %16 = vsyncpa %s15, 0
    %17 = vsyncpa [#allocation7], 0
    %s18 = scalar_lea.sflag [#allocation7], 1
    %19 = vsyncpa %s18, 0
    loop: start=0, step=1, limit=4
    $region2: #{tpu_custom_call.1} parent=1 // loop_pre_header
      _
    $region3: #{tpu_custom_call.1} parent=1 // loop_header
      %s21 = sphi 0, %s25
      %p22 = scmp.ge.s32.totalorder %s21, 4
      %s31 = sphi 0, %s33
      %s34 = sphi 0, %s31
      %s35 = sphi 0, %s34
      %s51 = sphi 0, %s35
      %s55 = sphi 0, %s55
      %s57 = sphi 0, %s55
      %s58 = sphi 0, %s57
      %s72 = sphi 0, %s58
      %s76 = sphi 0, %s76
      %s78 = sphi 0, %s76
      %s79 = sphi 0, %s78
      %s93 = sphi 0, %s79
      %s99 = sphi 0, %s101
      %s102 = sphi 0, %s99
      %s103 = sphi 0, %s102
      %s119 = sphi 0, %s103
      %s125 = sphi 0, %s127
      %s128 = sphi 0, %s125
      %s129 = sphi 0, %s128
      %s145 = sphi 0, %s129
      %s151 = sphi 0, %s153
      %s154 = sphi 0, %s151
      %s155 = sphi 0, %s154
      %s171 = sphi 0, %s155
    $region4: #{tpu_custom_call.1} parent=1 // loop_header_branch
      %24 = sbr.rel (%p22) target = $region8
    $region5: #{tpu_custom_call.1} parent=1 // loop_body
      %s26 = ssub.s32 %s21, 1
      %s27 = ssub.s32 %s21, 2
      %s28 = sadd.s32 %s21, 1
      %s29 = ssub.s32 %s21, %s28
      %p30 = scmp.eq.s32.totalorder %s29, 0
      %s32 = sadd.s32 %s31, 1
      %s33 = scalar_select %p30, %s31, %s32
      %p36 = pneg %p30
      %p37 = scmp.eq.s32.totalorder %s21, 1
      %p38 = por %p36, %p37
      %p39 = scmp.ne.s32.totalorder %s31, %s34
      %p40 = scmp.eq.s32.totalorder %s21, 0
      %p41 = por %p39, %p40
      %p42 = scmp.ne.s32.totalorder %s31, %s34
      %p43 = scmp.eq.s32.totalorder %s26, 1
      %p44 = por %p42, %p43
      %p45 = scmp.ne.s32.totalorder %s34, %s35
      %p46 = scmp.eq.s32.totalorder %s26, 0
      %p47 = por %p45, %p46
      %p48 = scmp.ne.s32.totalorder %s34, %s35
      %p49 = scmp.eq.s32.totalorder %s27, 1
      %p50 = por %p48, %p49
      %p52 = scmp.ne.s32.totalorder %s35, %s51
      %p53 = scmp.eq.s32.totalorder %s27, 0
      %p54 = por %p52, %p53
      %s56 = sadd.s32 %s55, 1
      %p59 = scmp.eq.s32.totalorder %s21, 1
      %p60 = scmp.ne.s32.totalorder %s55, %s57
      %p61 = scmp.eq.s32.totalorder %s21, 0
      %p62 = por %p60, %p61
      %p63 = scmp.ne.s32.totalorder %s55, %s57
      %p64 = scmp.eq.s32.totalorder %s26, 1
      %p65 = por %p63, %p64
      %p66 = scmp.ne.s32.totalorder %s57, %s58
      %p67 = scmp.eq.s32.totalorder %s26, 0
      %p68 = por %p66, %p67
      %p69 = scmp.ne.s32.totalorder %s57, %s58
      %p70 = scmp.eq.s32.totalorder %s27, 1
      %p71 = por %p69, %p70
      %p73 = scmp.ne.s32.totalorder %s58, %s72
      %p74 = scmp.eq.s32.totalorder %s27, 0
      %p75 = por %p73, %p74
      %s77 = sadd.s32 %s76, 1
      %p80 = scmp.eq.s32.totalorder %s21, 1
      %p81 = scmp.ne.s32.totalorder %s76, %s78
      %p82 = scmp.eq.s32.totalorder %s21, 0
      %p83 = por %p81, %p82
      %p84 = scmp.ne.s32.totalorder %s76, %s78
      %p85 = scmp.eq.s32.totalorder %s26, 1
      %p86 = por %p84, %p85
      %p87 = scmp.ne.s32.totalorder %s78, %s79
      %p88 = scmp.eq.s32.totalorder %s26, 0
      %p89 = por %p87, %p88
      %p90 = scmp.ne.s32.totalorder %s78, %s79
      %p91 = scmp.eq.s32.totalorder %s27, 1
      %p92 = por %p90, %p91
      %p94 = scmp.ne.s32.totalorder %s79, %s93
      %p95 = scmp.eq.s32.totalorder %s27, 0
      %p96 = por %p94, %p95
      %s97 = ssub.s32 %s21, %s28
      %p98 = scmp.eq.s32.totalorder %s97, 0
      %s100 = sadd.s32 %s99, 1
      %s101 = scalar_select %p98, %s99, %s100
      %p104 = pneg %p98
      %p105 = scmp.eq.s32.totalorder %s21, 1
      %p106 = por %p104, %p105
      %p107 = scmp.ne.s32.totalorder %s99, %s102
      %p108 = scmp.eq.s32.totalorder %s21, 0
      %p109 = por %p107, %p108
      %p110 = scmp.ne.s32.totalorder %s99, %s102
      %p111 = scmp.eq.s32.totalorder %s26, 1
      %p112 = por %p110, %p111
      %p113 = scmp.ne.s32.totalorder %s102, %s103
      %p114 = scmp.eq.s32.totalorder %s26, 0
      %p115 = por %p113, %p114
      %p116 = scmp.ne.s32.totalorder %s102, %s103
      %p117 = scmp.eq.s32.totalorder %s27, 1
      %p118 = por %p116, %p117
      %p120 = scmp.ne.s32.totalorder %s103, %s119
      %p121 = scmp.eq.s32.totalorder %s27, 0
      %p122 = por %p120, %p121
      %s123 = ssub.s32 %s21, %s28
      %p124 = scmp.eq.s32.totalorder %s123, 0
      %s126 = sadd.s32 %s125, 1
      %s127 = scalar_select %p124, %s125, %s126
      %p130 = pneg %p124
      %p131 = scmp.eq.s32.totalorder %s21, 1
      %p132 = por %p130, %p131
      %p133 = scmp.ne.s32.totalorder %s125, %s128
      %p134 = scmp.eq.s32.totalorder %s21, 0
      %p135 = por %p133, %p134
      %p136 = scmp.ne.s32.totalorder %s125, %s128
      %p137 = scmp.eq.s32.totalorder %s26, 1
      %p138 = por %p136, %p137
      %p139 = scmp.ne.s32.totalorder %s128, %s129
      %p140 = scmp.eq.s32.totalorder %s26, 0
      %p141 = por %p139, %p140
      %p142 = scmp.ne.s32.totalorder %s128, %s129
      %p143 = scmp.eq.s32.totalorder %s27, 1
      %p144 = por %p142, %p143
      %p146 = scmp.ne.s32.totalorder %s129, %s145
      %p147 = scmp.eq.s32.totalorder %s27, 0
      %p148 = por %p146, %p147
      %s149 = ssub.s32 %s21, %s28
      %p150 = scmp.eq.s32.totalorder %s149, 0
      %s152 = sadd.s32 %s151, 1
      %s153 = scalar_select %p150, %s151, %s152
      %p156 = pneg %p150
      %p157 = scmp.eq.s32.totalorder %s21, 1
      %p158 = por %p156, %p157
      %p159 = scmp.ne.s32.totalorder %s151, %s154
      %p160 = scmp.eq.s32.totalorder %s21, 0
      %p161 = por %p159, %p160
      %p162 = scmp.ne.s32.totalorder %s151, %s154
      %p163 = scmp.eq.s32.totalorder %s26, 1
      %p164 = por %p162, %p163
      %p165 = scmp.ne.s32.totalorder %s154, %s155
      %p166 = scmp.eq.s32.totalorder %s26, 0
      %p167 = por %p165, %p166
      %p168 = scmp.ne.s32.totalorder %s154, %s155
      %p169 = scmp.eq.s32.totalorder %s27, 1
      %p170 = por %p168, %p169
      %p172 = scmp.ne.s32.totalorder %s155, %s171
      %p173 = scmp.eq.s32.totalorder %s27, 0
      %p174 = por %p172, %p173
      %p175 = scmp.le.s32.totalorder 1, %s21
      %p176 = scmp.lt.s32.totalorder %s21, 3
      %p177 = pnand %p175, %p176
      %p178 = pneg %p177
      // Predicated region
      $region9: #{tpu_custom_call.1} parent=5 // pred_check
        _
      $region10: #{tpu_custom_call.1} parent=5 // pred_check_branch
        %180 = sbr.rel (%p177) target = $region12
      $region11: #{tpu_custom_call.1} parent=5 // pred_region
        %s181 = ssub.s32 %s21, 1
        // Predicated region
        $region13: #{tpu_custom_call.1} parent=11 // pred_check
          %p182 = pneg %p68
        $region14: #{tpu_custom_call.1} parent=11 // pred_check_branch
          %184 = sbr.rel (%p182) target = $region16
        $region15: #{tpu_custom_call.1} parent=11 // pred_region
          _
        $region16: #{tpu_custom_call.1} parent=11 // pred_fallthru
          _
        // Predicated region
        $region17: #{tpu_custom_call.1} parent=11 // pred_check
          %p185 = pneg %p89
        $region18: #{tpu_custom_call.1} parent=11 // pred_check_branch
          %187 = sbr.rel (%p185) target = $region20
        $region19: #{tpu_custom_call.1} parent=11 // pred_region
          _
        $region20: #{tpu_custom_call.1} parent=11 // pred_fallthru
          _
      $region12: #{tpu_custom_call.1} parent=5 // pred_fallthru
        _
      %p188 = scmp.lt.s32.totalorder %s21, 2
      // Predicated region
      $region21: #{tpu_custom_call.1} parent=5 // pred_check
        %p189 = pneg %p188
      $region22: #{tpu_custom_call.1} parent=5 // pred_check_branch
        %191 = sbr.rel (%p189) target = $region24
      $region23: #{tpu_custom_call.1} parent=5 // pred_region
        // Predicated region
        $region25: #{tpu_custom_call.1} parent=23 // pred_check
          %p192 = pneg %p41
        $region26: #{tpu_custom_call.1} parent=23 // pred_check_branch
          %194 = sbr.rel (%p192) target = $region28
        $region27: #{tpu_custom_call.1} parent=23 // pred_region
          %s195 = sand.u32 %s31, 1
          %s196 = scalar_lea.sflag [#allocation3], %s195
          %s197 = sand.u32 %s31, 1
          %s198 = smul.addr %s197, 128
          %s199 = scalar_lea.vmem [#allocation2], %s198
          %s200 = smul.u32 4, %s21
          %s202 = ssub.s32 2048, 2048
          %203 = vsyncadd %s196, %s202
          %s204 = smul.addr %s200, 4
          %s205 = smul.addr %s204, 128
          %s206 = scalar_lea.hbm %s0, %s205
          %s207 = sshll.u32 %s199, 4
          %s208 = int_to_ptr.vmem [resolvable:$true] %s207
          %213 = dma.hbm_to_vmem [thread:$0]  %s206, 2048, %s208, %s196, 128, 128, 8
        $region28: #{tpu_custom_call.1} parent=23 // pred_fallthru
          _
      $region24: #{tpu_custom_call.1} parent=5 // pred_fallthru
        _
      %p214 = scmp.le.s32.totalorder 1, %s21
      %p215 = scmp.lt.s32.totalorder %s21, 3
      %p216 = pnand %p214, %p215
      %p217 = pneg %p216
      // Predicated region
      $region29: #{tpu_custom_call.1} parent=5 // pred_check
        _
      $region30: #{tpu_custom_call.1} parent=5 // pred_check_branch
        %219 = sbr.rel (%p216) target = $region32
      $region31: #{tpu_custom_call.1} parent=5 // pred_region
        %s220 = ssub.s32 %s21, 1
        %s221 = sand.u32 %s34, 1
        %s222 = scalar_lea.sflag [#allocation3], %s221
        %s223 = sand.u32 %s34, 1
        %s224 = smul.addr %s223, 128
        %s225 = scalar_lea.vmem [#allocation2], %s224
        // Predicated region
        $region33: #{tpu_custom_call.1} parent=31 // pred_check
          %p226 = pneg %p47
        $region34: #{tpu_custom_call.1} parent=31 // pred_check_branch
          %228 = sbr.rel (%p226) target = $region36
        $region35: #{tpu_custom_call.1} parent=31 // pred_region
          %229 = dma.done %s222, 2048
        $region36: #{tpu_custom_call.1} parent=31 // pred_fallthru
          _
        %s230 = sand.u32 %s34, 1
        %s231 = scalar_lea.sflag [#allocation3], %s230
        %s232 = sand.u32 %s34, 1
        %s233 = smul.addr %s232, 128
        %s234 = scalar_lea.vmem [#allocation2], %s233
        %p235 = pneg %p47
        %p236 = pneg %p44
        %p237 = pneg %p68
        %p238 = pneg %p65
        %p239 = pneg %p89
        %p240 = pneg %p86
        %p241 = pneg %p115
        %p242 = pneg %p112
        %s243 = sand.u32 %s102, 1
        %s244 = scalar_lea.sflag [#allocation4], %s243
        %s245 = sand.u32 %s102, 1
        %s246 = smul.addr %s245, 128
        %s247 = scalar_lea.vmem [#allocation5], %s246
        %p248 = pneg %p141
        %p249 = pneg %p138
        %s250 = sand.u32 %s26, 1
        %s251 = scalar_lea.sflag [#allocation7], %s250
        %s252 = sand.u32 %s128, 1
        %s253 = smul.addr %s252, 4
        %s254 = scalar_lea.vmem [#allocation6], %s253
        %p255 = pneg %p167
        %p256 = pneg %p164
        %s257 = sand.u32 %s26, 1
        %s258 = scalar_lea.sflag [#allocation7], %s257
        %s259 = sand.u32 %s154, 1
        %s260 = smul.addr %s259, 4
        %s261 = scalar_lea.vmem [#allocation8], %s260
        %s262 = smul.u32 4, %s26
        %s263 = smul.u32 4, %s26
        %s264 = smul.u32 4, %s26
        %s265 = smul.u32 4, %s26
        %v266 = vld [vmem:[%s1] sm:$0x1]
        %v267 = vld [vmem:[%s2] sm:$0x1]
        %v268 = vld [vmem:[%s225] sm:$0xff]
        %v269 = vld [vmem:[%s225 + $0x8] sm:$0xff]
        %v270 = vld [vmem:[%s225 + $0x10] sm:$0xff]
        %v271 = vld [vmem:[%s225 + $0x18] sm:$0xff]
        %v272 = vld [vmem:[%s225 + $0x20] sm:$0xff]
        %v273 = vld [vmem:[%s225 + $0x28] sm:$0xff]
        %v274 = vld [vmem:[%s225 + $0x30] sm:$0xff]
        %v275 = vld [vmem:[%s225 + $0x38] sm:$0xff]
        %v276 = vld [vmem:[%s225 + $0x40] sm:$0xff]
        %v277 = vld [vmem:[%s225 + $0x48] sm:$0xff]
        %v278 = vld [vmem:[%s225 + $0x50] sm:$0xff]
        %v279 = vld [vmem:[%s225 + $0x58] sm:$0xff]
        %v280 = vld [vmem:[%s225 + $0x60] sm:$0xff]
        %v281 = vld [vmem:[%s225 + $0x68] sm:$0xff]
        %v282 = vld [vmem:[%s225 + $0x70] sm:$0xff]
        %v283 = vld [vmem:[%s225 + $0x78] sm:$0xff]
        %v284 = vadd.f32 %v268, %v269
        %v285 = vadd.f32 %v284, %v270
        %v286 = vadd.f32 %v285, %v271
        %v287 = vrot.slane %v286, 4
        %v288 = vadd.f32 %v286, %v287
        %v289 = vrot.slane %v288, 2
        %v290 = vadd.f32 %v288, %v289
        %v291 = vrot.slane %v290, 1
        %v292 = vadd.f32 %v290, %v291
        %v293 = vadd.f32 %v272, %v273
        %v294 = vadd.f32 %v293, %v274
        %v295 = vadd.f32 %v294, %v275
        %v296 = vrot.slane %v295, 4
        %v297 = vadd.f32 %v295, %v296
        %v298 = vrot.slane %v297, 2
        %v299 = vadd.f32 %v297, %v298
        %v300 = vrot.slane %v299, 1
        %v301 = vadd.f32 %v299, %v300
        %v302 = vadd.f32 %v276, %v277
        %v303 = vadd.f32 %v302, %v278
        %v304 = vadd.f32 %v303, %v279
        %v305 = vrot.slane %v304, 4
        %v306 = vadd.f32 %v304, %v305
        %v307 = vrot.slane %v306, 2
        %v308 = vadd.f32 %v306, %v307
        %v309 = vrot.slane %v308, 1
        %v310 = vadd.f32 %v308, %v309
        %v311 = vadd.f32 %v280, %v281
        %v312 = vadd.f32 %v311, %v282
        %v313 = vadd.f32 %v312, %v283
        %v314 = vrot.slane %v313, 4
        %v315 = vadd.f32 %v313, %v314
        %v316 = vrot.slane %v315, 2
        %v317 = vadd.f32 %v315, %v316
        %v318 = vrot.slane %v317, 1
        %v319 = vadd.f32 %v317, %v318
        %vm324 = vcmask 1041409
        %v325 = vsel %vm324, %v301, %v292
        %vm326 = vcmask 1042434
        %v327 = vsel %vm326, %v310, %v325
        %vm328 = vcmask 1043459
        %v329 = vsel %vm328, %v319, %v327
        %331 = vrot.lane.b32.xlu0 %v329, 16
        %v332 = vpop.permute.xlu0 %331
        %v334 = vrot.slane %v332, 1
        %v335 = vrot.slane %v332, 2
        %v336 = vrot.slane %v332, 3
        %v341 = vadd.f32 %v292, %v332
        %v342 = vadd.f32 %v301, %v334
        %v343 = vadd.f32 %v310, %v335
        %v344 = vadd.f32 %v319, %v336
        %v349 = vrot.slane %v342, 7
        %v350 = vsel %vm324, %v349, %v341
        %v351 = vrot.slane %v343, 6
        %v352 = vsel %vm326, %v351, %v350
        %v353 = vrot.slane %v344, 5
        %v354 = vsel %vm328, %v353, %v352
        %356 = vrot.lane.b32.xlu0 %v354, 32
        %v357 = vpop.permute.xlu0 %356
        %v359 = vrot.slane %v357, 1
        %v360 = vrot.slane %v357, 2
        %v361 = vrot.slane %v357, 3
        %v366 = vadd.f32 %v341, %v357
        %v367 = vadd.f32 %v342, %v359
        %v368 = vadd.f32 %v343, %v360
        %v369 = vadd.f32 %v344, %v361
        %v374 = vrot.slane %v367, 7
        %v375 = vsel %vm324, %v374, %v366
        %v376 = vrot.slane %v368, 6
        %v377 = vsel %vm326, %v376, %v375
        %v378 = vrot.slane %v369, 5
        %v379 = vsel %vm328, %v378, %v377
        %381 = vrot.lane.b32.xlu0 %v379, 64
        %v382 = vpop.permute.xlu0 %381
        %v384 = vrot.slane %v382, 1
        %v385 = vrot.slane %v382, 2
        %v386 = vrot.slane %v382, 3
        %v391 = vadd.f32 %v366, %v382
        %v392 = vadd.f32 %v367, %v384
        %v393 = vadd.f32 %v368, %v385
        %v394 = vadd.f32 %v369, %v386
        %v395 = vmul.f32 %v391, 0.00390625
        %v396 = vmul.f32 %v392, 0.00390625
        %v397 = vmul.f32 %v393, 0.00390625
        %v398 = vmul.f32 %v394, 0.00390625
        %v399 = vlaneseq
        %v400 = vshrl.u32 %v399, 7
        %v401 = vsub.s32 0, %v400
        %v402 = vrot.slane %v395, %v401
        %v403 = vlaneseq
        %v404 = vshrl.u32 %v403, 7
        %v405 = vsub.s32 0, %v404
        %v406 = vrot.slane %v396, %v405
        %v407 = vlaneseq
        %v408 = vshrl.u32 %v407, 7
        %v409 = vsub.s32 0, %v408
        %v410 = vrot.slane %v397, %v409
        %v411 = vlaneseq
        %v412 = vshrl.u32 %v411, 7
        %v413 = vsub.s32 0, %v412
        %v414 = vrot.slane %v398, %v413
        %v415 = vsub.f32 %v268, %v402
        %v416 = vsub.f32 %v269, %v402
        %v417 = vsub.f32 %v270, %v402
        %v418 = vsub.f32 %v271, %v402
        %v419 = vsub.f32 %v272, %v406
        %v420 = vsub.f32 %v273, %v406
        %v421 = vsub.f32 %v274, %v406
        %v422 = vsub.f32 %v275, %v406
        %v423 = vsub.f32 %v276, %v410
        %v424 = vsub.f32 %v277, %v410
        %v425 = vsub.f32 %v278, %v410
        %v426 = vsub.f32 %v279, %v410
        %v427 = vsub.f32 %v280, %v414
        %v428 = vsub.f32 %v281, %v414
        %v429 = vsub.f32 %v282, %v414
        %v430 = vsub.f32 %v283, %v414
        %v431 = vmul.f32 %v415, %v415
        %v432 = vmul.f32 %v416, %v416
        %v433 = vmul.f32 %v417, %v417
        %v434 = vmul.f32 %v418, %v418
        %v435 = vmul.f32 %v419, %v419
        %v436 = vmul.f32 %v420, %v420
        %v437 = vmul.f32 %v421, %v421
        %v438 = vmul.f32 %v422, %v422
        %v439 = vmul.f32 %v423, %v423
        %v440 = vmul.f32 %v424, %v424
        %v441 = vmul.f32 %v425, %v425
        %v442 = vmul.f32 %v426, %v426
        %v443 = vmul.f32 %v427, %v427
        %v444 = vmul.f32 %v428, %v428
        %v445 = vmul.f32 %v429, %v429
        %v446 = vmul.f32 %v430, %v430
        %v447 = vadd.f32 %v431, %v432
        %v448 = vadd.f32 %v447, %v433
        %v449 = vadd.f32 %v448, %v434
        %v450 = vrot.slane %v449, 4
        %v451 = vadd.f32 %v449, %v450
        %v452 = vrot.slane %v451, 2
        %v453 = vadd.f32 %v451, %v452
        %v454 = vrot.slane %v453, 1
        %v455 = vadd.f32 %v453, %v454
        %v456 = vadd.f32 %v435, %v436
        %v457 = vadd.f32 %v456, %v437
        %v458 = vadd.f32 %v457, %v438
        %v459 = vrot.slane %v458, 4
        %v460 = vadd.f32 %v458, %v459
        %v461 = vrot.slane %v460, 2
        %v462 = vadd.f32 %v460, %v461
        %v463 = vrot.slane %v462, 1
        %v464 = vadd.f32 %v462, %v463
        %v465 = vadd.f32 %v439, %v440
        %v466 = vadd.f32 %v465, %v441
        %v467 = vadd.f32 %v466, %v442
        %v468 = vrot.slane %v467, 4
        %v469 = vadd.f32 %v467, %v468
        %v470 = vrot.slane %v469, 2
        %v471 = vadd.f32 %v469, %v470
        %v472 = vrot.slane %v471, 1
        %v473 = vadd.f32 %v471, %v472
        %v474 = vadd.f32 %v443, %v444
        %v475 = vadd.f32 %v474, %v445
        %v476 = vadd.f32 %v475, %v446
        %v477 = vrot.slane %v476, 4
        %v478 = vadd.f32 %v476, %v477
        %v479 = vrot.slane %v478, 2
        %v480 = vadd.f32 %v478, %v479
        %v481 = vrot.slane %v480, 1
        %v482 = vadd.f32 %v480, %v481
        %v487 = vsel %vm324, %v464, %v455
        %v488 = vsel %vm326, %v473, %v487
        %v489 = vsel %vm328, %v482, %v488
        %491 = vrot.lane.b32.xlu0 %v489, 16
        %v492 = vpop.permute.xlu0 %491
        %v494 = vrot.slane %v492, 1
        %v495 = vrot.slane %v492, 2
        %v496 = vrot.slane %v492, 3
        %v501 = vadd.f32 %v455, %v492
        %v502 = vadd.f32 %v464, %v494
        %v503 = vadd.f32 %v473, %v495
        %v504 = vadd.f32 %v482, %v496
        %v509 = vrot.slane %v502, 7
        %v510 = vsel %vm324, %v509, %v501
        %v511 = vrot.slane %v503, 6
        %v512 = vsel %vm326, %v511, %v510
        %v513 = vrot.slane %v504, 5
        %v514 = vsel %vm328, %v513, %v512
        %516 = vrot.lane.b32.xlu0 %v514, 32
        %v517 = vpop.permute.xlu0 %516
        %v519 = vrot.slane %v517, 1
        %v520 = vrot.slane %v517, 2
        %v521 = vrot.slane %v517, 3
        %v526 = vadd.f32 %v501, %v517
        %v527 = vadd.f32 %v502, %v519
        %v528 = vadd.f32 %v503, %v520
        %v529 = vadd.f32 %v504, %v521
        %v534 = vrot.slane %v527, 7
        %v535 = vsel %vm324, %v534, %v526
        %v536 = vrot.slane %v528, 6
        %v537 = vsel %vm326, %v536, %v535
        %v538 = vrot.slane %v529, 5
        %v539 = vsel %vm328, %v538, %v537
        %541 = vrot.lane.b32.xlu0 %v539, 64
        %v542 = vpop.permute.xlu0 %541
        %v544 = vrot.slane %v542, 1
        %v545 = vrot.slane %v542, 2
        %v546 = vrot.slane %v542, 3
        %v551 = vadd.f32 %v526, %v542
        %v552 = vadd.f32 %v527, %v544
        %v553 = vadd.f32 %v528, %v545
        %v554 = vadd.f32 %v529, %v546
        %v555 = vmul.f32 %v551, 0.00390625
        %v556 = vmul.f32 %v552, 0.00390625
        %v557 = vmul.f32 %v553, 0.00390625
        %v558 = vmul.f32 %v554, 0.00390625
        %v559 = vadd.f32 %v555, 1e-05
        %v560 = vadd.f32 %v556, 1e-05
        %v561 = vadd.f32 %v557, 1e-05
        %v562 = vadd.f32 %v558, 1e-05
        %v563 = vrsqrt.pop %v559
        %v564 = vrsqrt.pop %v560
        %v565 = vrsqrt.pop %v561
        %v566 = vrsqrt.pop %v562
        %v568 = vlaneseq
        %v569 = vshrl.u32 %v568, 7
        %v570 = vsub.s32 0, %v569
        %v571 = vrot.slane %v266, %v570
        %v577 = vrot.slane %v564, 7
        %v578 = vsel %vm324, %v577, %v563
        %v579 = vrot.slane %v565, 6
        %v580 = vsel %vm326, %v579, %v578
        %v581 = vrot.slane %v566, 5
        %v582 = vsel %vm328, %v581, %v580
        %v584 = vmul.f32 %v571, %v582
        %v586 = vrot.slane %v584, 1
        %v587 = vrot.slane %v584, 2
        %v588 = vrot.slane %v584, 3
        %v593 = vmul.f32 %v395, %v584
        %v594 = vmul.f32 %v396, %v586
        %v595 = vmul.f32 %v397, %v587
        %v596 = vmul.f32 %v398, %v588
        %v598 = vlaneseq
        %v599 = vshrl.u32 %v598, 7
        %v600 = vsub.s32 0, %v599
        %v601 = vrot.slane %v267, %v600
        %v607 = vrot.slane %v594, 7
        %v608 = vsel %vm324, %v607, %v593
        %v609 = vrot.slane %v595, 6
        %v610 = vsel %vm326, %v609, %v608
        %v611 = vrot.slane %v596, 5
        %v612 = vsel %vm328, %v611, %v610
        %v614 = vsub.f32 %v601, %v612
        %v616 = vunpack.c.l.s4 1966171168
        %v617 = vunpack.c.0.s8 %v616
        %v618 = vlaneseq
        %v619 = vshrl.u32 %v618, 7
        %v620 = vsub.s32 %v617, %v619
        %v621 = vrot.slane %v584, %v620
        %v622 = vcombine.high %v621, %v621
        %v624 = vunpack.c.l.s4 1966171168
        %v625 = vunpack.c.0.s8 %v624
        %v626 = vlaneseq
        %v627 = vshrl.u32 %v626, 7
        %v628 = vsub.s32 %v625, %v627
        %v629 = vrot.slane %v621, %v628
        %v631 = vunpack.c.l.s4 1966171168
        %v632 = vunpack.c.0.s8 %v631
        %v633 = vlaneseq
        %v634 = vshrl.u32 %v633, 7
        %v635 = vsub.s32 %v632, %v634
        %v636 = vrot.slane %v622, %v635
        %v637 = vcombine.high %v629, %v629
        %v638 = vcombine.high %v636, %v636
        %v639 = vlaneseq
        %v640 = vshrl.u32 %v639, 7
        %v641 = vsub.s32 0, %v640
        %v642 = vrot.slane %v629, %v641
        %v643 = vlaneseq
        %v644 = vshrl.u32 %v643, 7
        %v645 = vsub.s32 0, %v644
        %v646 = vrot.slane %v636, %v645
        %v647 = vlaneseq
        %v648 = vshrl.u32 %v647, 7
        %v649 = vsub.s32 0, %v648
        %v650 = vrot.slane %v637, %v649
        %v651 = vlaneseq
        %v652 = vshrl.u32 %v651, 7
        %v653 = vsub.s32 0, %v652
        %v654 = vrot.slane %v638, %v653
        %v659 = vmul.f32 %v268, %v642
        %v660 = vmul.f32 %v269, %v642
        %v661 = vmul.f32 %v270, %v642
        %v662 = vmul.f32 %v271, %v642
        %v663 = vmul.f32 %v272, %v646
        %v664 = vmul.f32 %v273, %v646
        %v665 = vmul.f32 %v274, %v646
        %v666 = vmul.f32 %v275, %v646
        %v667 = vmul.f32 %v276, %v650
        %v668 = vmul.f32 %v277, %v650
        %v669 = vmul.f32 %v278, %v650
        %v670 = vmul.f32 %v279, %v650
        %v671 = vmul.f32 %v280, %v654
        %v672 = vmul.f32 %v281, %v654
        %v673 = vmul.f32 %v282, %v654
        %v674 = vmul.f32 %v283, %v654
        %v677 = vunpack.c.l.s4 1966171168
        %v678 = vunpack.c.0.s8 %v677
        %v679 = vlaneseq
        %v680 = vshrl.u32 %v679, 7
        %v681 = vsub.s32 %v678, %v680
        %v682 = vrot.slane %v614, %v681
        %v683 = vcombine.high %v682, %v682
        %v685 = vunpack.c.l.s4 1966171168
        %v686 = vunpack.c.0.s8 %v685
        %v687 = vlaneseq
        %v688 = vshrl.u32 %v687, 7
        %v689 = vsub.s32 %v686, %v688
        %v690 = vrot.slane %v682, %v689
        %v692 = vunpack.c.l.s4 1966171168
        %v693 = vunpack.c.0.s8 %v692
        %v694 = vlaneseq
        %v695 = vshrl.u32 %v694, 7
        %v696 = vsub.s32 %v693, %v695
        %v697 = vrot.slane %v683, %v696
        %v698 = vcombine.high %v690, %v690
        %v699 = vcombine.high %v697, %v697
        %v700 = vlaneseq
        %v701 = vshrl.u32 %v700, 7
        %v702 = vsub.s32 0, %v701
        %v703 = vrot.slane %v690, %v702
        %v704 = vlaneseq
        %v705 = vshrl.u32 %v704, 7
        %v706 = vsub.s32 0, %v705
        %v707 = vrot.slane %v697, %v706
        %v708 = vlaneseq
        %v709 = vshrl.u32 %v708, 7
        %v710 = vsub.s32 0, %v709
        %v711 = vrot.slane %v698, %v710
        %v712 = vlaneseq
        %v713 = vshrl.u32 %v712, 7
        %v714 = vsub.s32 0, %v713
        %v715 = vrot.slane %v699, %v714
        %v720 = vadd.f32 %v659, %v703
        %v721 = vadd.f32 %v660, %v703
        %v722 = vadd.f32 %v661, %v703
        %v723 = vadd.f32 %v662, %v703
        %v724 = vadd.f32 %v663, %v707
        %v725 = vadd.f32 %v664, %v707
        %v726 = vadd.f32 %v665, %v707
        %v727 = vadd.f32 %v666, %v707
        %v728 = vadd.f32 %v667, %v711
        %v729 = vadd.f32 %v668, %v711
        %v730 = vadd.f32 %v669, %v711
        %v731 = vadd.f32 %v670, %v711
        %v732 = vadd.f32 %v671, %v715
        %v733 = vadd.f32 %v672, %v715
        %v734 = vadd.f32 %v673, %v715
        %v735 = vadd.f32 %v674, %v715
        %736 = vst [vmem:[%s247] sm:$0xff] %v720
        %737 = vst [vmem:[%s247 + $0x8] sm:$0xff] %v721
        %738 = vst [vmem:[%s247 + $0x10] sm:$0xff] %v722
        %739 = vst [vmem:[%s247 + $0x18] sm:$0xff] %v723
        %740 = vst [vmem:[%s247 + $0x20] sm:$0xff] %v724
        %741 = vst [vmem:[%s247 + $0x28] sm:$0xff] %v725
        %742 = vst [vmem:[%s247 + $0x30] sm:$0xff] %v726
        %743 = vst [vmem:[%s247 + $0x38] sm:$0xff] %v727
        %744 = vst [vmem:[%s247 + $0x40] sm:$0xff] %v728
        %745 = vst [vmem:[%s247 + $0x48] sm:$0xff] %v729
        %746 = vst [vmem:[%s247 + $0x50] sm:$0xff] %v730
        %747 = vst [vmem:[%s247 + $0x58] sm:$0xff] %v731
        %748 = vst [vmem:[%s247 + $0x60] sm:$0xff] %v732
        %749 = vst [vmem:[%s247 + $0x68] sm:$0xff] %v733
        %750 = vst [vmem:[%s247 + $0x70] sm:$0xff] %v734
        %751 = vst [vmem:[%s247 + $0x78] sm:$0xff] %v735
        %752 = vst [vmem:[%s254] sm:$0x1] %v395
        %753 = vst [vmem:[%s254 + $0x1] sm:$0x1] %v396
        %754 = vst [vmem:[%s254 + $0x2] sm:$0x1] %v397
        %755 = vst [vmem:[%s254 + $0x3] sm:$0x1] %v398
        %v756 = vrsqrt.pop %v559
        %v757 = vmul.f32 %v559, %v756
        %vm758 = vcmp.eq.f32.partialorder %v559, inf
        %v759 = vsel %vm758, %v559, %v757
        %vm760 = vcmp.eq.f32.partialorder %v559, 0.0
        %v761 = vand.u32 %v559, 2147483648
        %v762 = vsel %vm760, %v761, %v759
        %v763 = vrsqrt.pop %v560
        %v764 = vmul.f32 %v560, %v763
        %vm765 = vcmp.eq.f32.partialorder %v560, inf
        %v766 = vsel %vm765, %v560, %v764
        %vm767 = vcmp.eq.f32.partialorder %v560, 0.0
        %v768 = vand.u32 %v560, 2147483648
        %v769 = vsel %vm767, %v768, %v766
        %v770 = vrsqrt.pop %v561
        %v771 = vmul.f32 %v561, %v770
        %vm772 = vcmp.eq.f32.partialorder %v561, inf
        %v773 = vsel %vm772, %v561, %v771
        %vm774 = vcmp.eq.f32.partialorder %v561, 0.0
        %v775 = vand.u32 %v561, 2147483648
        %v776 = vsel %vm774, %v775, %v773
        %v777 = vrsqrt.pop %v562
        %v778 = vmul.f32 %v562, %v777
        %vm779 = vcmp.eq.f32.partialorder %v562, inf
        %v780 = vsel %vm779, %v562, %v778
        %vm781 = vcmp.eq.f32.partialorder %v562, 0.0
        %v782 = vand.u32 %v562, 2147483648
        %v783 = vsel %vm781, %v782, %v780
        %784 = vst [vmem:[%s261] sm:$0x1] %v762
        %785 = vst [vmem:[%s261 + $0x1] sm:$0x1] %v769
        %786 = vst [vmem:[%s261 + $0x2] sm:$0x1] %v776
        %787 = vst [vmem:[%s261 + $0x3] sm:$0x1] %v783
        %s788 = sand.u32 %s102, 1
        %s789 = scalar_lea.sflag [#allocation4], %s788
        %s790 = sand.u32 %s102, 1
        %s791 = smul.addr %s790, 128
        %s792 = scalar_lea.vmem [#allocation5], %s791
        %s793 = sand.u32 %s26, 1
        %s794 = scalar_lea.sflag [#allocation7], %s793
        %s795 = sand.u32 %s128, 1
        %s796 = smul.addr %s795, 4
        %s797 = scalar_lea.vmem [#allocation6], %s796
        %s798 = sand.u32 %s26, 1
        %s799 = scalar_lea.sflag [#allocation7], %s798
        %s800 = sand.u32 %s154, 1
        %s801 = smul.addr %s800, 4
        %s802 = scalar_lea.vmem [#allocation8], %s801
        // Predicated region
        $region37: #{tpu_custom_call.1} parent=31 // pred_check
          %p803 = pneg %p112
        $region38: #{tpu_custom_call.1} parent=31 // pred_check_branch
          %805 = sbr.rel (%p803) target = $region40
        $region39: #{tpu_custom_call.1} parent=31 // pred_region
          %s806 = smul.u32 4, %s26
          %s808 = ssub.s32 2048, 2048
          %809 = vsyncadd %s789, %s808
          %s810 = smul.addr %s806, 4
          %s811 = smul.addr %s810, 128
          %s812 = scalar_lea.hbm %s3, %s811
          %s813 = sshll.u32 %s792, 4
          %s814 = int_to_ptr.vmem [resolvable:$true] %s813
          %819 = dma.vmem_to_hbm [thread:$0]  %s814, 2048, %s812, %s789, 128, 128, 8
        $region40: #{tpu_custom_call.1} parent=31 // pred_fallthru
          _
        // Predicated region
        $region41: #{tpu_custom_call.1} parent=31 // pred_check
          %p820 = pneg %p138
        $region42: #{tpu_custom_call.1} parent=31 // pred_check_branch
          %822 = sbr.rel (%p820) target = $region44
        $region43: #{tpu_custom_call.1} parent=31 // pred_region
          %s823 = smul.u32 4, %s26
          %s825 = ssub.s32 64, 64
          %826 = vsyncadd %s794, %s825
          %s827 = smul.addr %s823, 16
          %s828 = scalar_lea.hbm %s4, %s827
          %s829 = sshll.u32 %s797, 4
          %s830 = int_to_ptr.vmem [resolvable:$true] %s829
          %835 = dma.vmem_to_hbm [thread:$0]  %s830, 64, %s828, %s794, 16, 16, 1
        $region44: #{tpu_custom_call.1} parent=31 // pred_fallthru
          _
        // Predicated region
        $region45: #{tpu_custom_call.1} parent=31 // pred_check
          %p836 = pneg %p164
        $region46: #{tpu_custom_call.1} parent=31 // pred_check_branch
          %838 = sbr.rel (%p836) target = $region48
        $region47: #{tpu_custom_call.1} parent=31 // pred_region
          %s839 = smul.u32 4, %s26
          %s841 = ssub.s32 64, 64
          %842 = vsyncadd %s799, %s841
          %s843 = smul.addr %s839, 16
          %s844 = scalar_lea.hbm %s5, %s843
          %s845 = sshll.u32 %s802, 4
          %s846 = int_to_ptr.vmem [resolvable:$true] %s845
          %851 = dma.vmem_to_hbm [thread:$0]  %s846, 64, %s844, %s799, 16, 16, 1
        $region48: #{tpu_custom_call.1} parent=31 // pred_fallthru
          _
      $region32: #{tpu_custom_call.1} parent=5 // pred_fallthru
        _
      %p852 = scmp.le.s32.totalorder 2, %s21
      // Predicated region
      $region49: #{tpu_custom_call.1} parent=5 // pred_check
        %p853 = pneg %p852
      $region50: #{tpu_custom_call.1} parent=5 // pred_check_branch
        %855 = sbr.rel (%p853) target = $region52
      $region51: #{tpu_custom_call.1} parent=5 // pred_region
        %s856 = ssub.s32 %s21, 2
        // Predicated region
        $region53: #{tpu_custom_call.1} parent=51 // pred_check
          %p857 = pneg %p118
        $region54: #{tpu_custom_call.1} parent=51 // pred_check_branch
          %859 = sbr.rel (%p857) target = $region56
        $region55: #{tpu_custom_call.1} parent=51 // pred_region
          %s860 = sand.u32 %s103, 1
          %s861 = scalar_lea.sflag [#allocation4], %s860
          %s862 = sand.u32 %s103, 1
          %s863 = smul.addr %s862, 128
          %s864 = scalar_lea.vmem [#allocation5], %s863
          %865 = dma.done %s861, 2048
        $region56: #{tpu_custom_call.1} parent=51 // pred_fallthru
          _
        // Predicated region
        $region57: #{tpu_custom_call.1} parent=51 // pred_check
          %p866 = pneg %p144
        $region58: #{tpu_custom_call.1} parent=51 // pred_check_branch
          %868 = sbr.rel (%p866) target = $region60
        $region59: #{tpu_custom_call.1} parent=51 // pred_region
          %s869 = sand.u32 %s27, 1
          %s870 = scalar_lea.sflag [#allocation7], %s869
          %s871 = sand.u32 %s129, 1
          %s872 = smul.addr %s871, 4
          %s873 = scalar_lea.vmem [#allocation6], %s872
          %874 = dma.done %s870, 64
        $region60: #{tpu_custom_call.1} parent=51 // pred_fallthru
          _
        // Predicated region
        $region61: #{tpu_custom_call.1} parent=51 // pred_check
          %p875 = pneg %p170
        $region62: #{tpu_custom_call.1} parent=51 // pred_check_branch
          %877 = sbr.rel (%p875) target = $region64
        $region63: #{tpu_custom_call.1} parent=51 // pred_region
          %s878 = sand.u32 %s27, 1
          %s879 = scalar_lea.sflag [#allocation7], %s878
          %s880 = sand.u32 %s155, 1
          %s881 = smul.addr %s880, 4
          %s882 = scalar_lea.vmem [#allocation8], %s881
          %883 = dma.done %s879, 64
        $region64: #{tpu_custom_call.1} parent=51 // pred_fallthru
          _
      $region52: #{tpu_custom_call.1} parent=5 // pred_fallthru
        _
    $region6: #{tpu_custom_call.1} parent=1 // loop_footer
      %s25 = sadd.s32 1, %s21
    $region7: #{tpu_custom_call.1} parent=1 // loop_footer_branch
      %20 = sbr.rel target = $region3
    $region8: #{tpu_custom_call.1} parent=1 // loop_exit
      _
    %884 = vsyncpa [#allocation3], 1
    %s885 = scalar_lea.sflag [#allocation3], 1
    %886 = vsyncpa %s885, 1
    %887 = vsyncpa [#allocation4], 1
    %s888 = scalar_lea.sflag [#allocation4], 1
    %889 = vsyncpa %s888, 1
    %890 = vsyncpa [#allocation7], 1
    %s891 = scalar_lea.sflag [#allocation7], 1
    %892 = vsyncpa %s891, 1

</llo_original>
